<compile_context>
chip_gen: v7x
topology: tpu7x:2x2x1
jax: 0.10.0
libtpu: 0.0.40
codegen_flags: <defaults>
</compile_context>

<pallas_src>
import jax
import jax.numpy as jnp
from jax.experimental import pallas as pl
from jax.experimental.pallas import tpu as pltpu

_LANE = 128
_SUBLANE = 8


def _round_up(x: int, m: int) -> int:
    return (x + m - 1) // m * m


def _mlp_kernel(x_ref, w1_ref, b1_ref, w2_ref, b2_ref, o_ref):
    """Fused tabular MLP forward for one batch tile.

    x_ref : (TB, F)        input feature tile (bf16)
    w1_ref: (F, Hp)        first linear weight (bf16, H padded to 128)
    b1_ref: (1, Hp)        first linear bias (f32)
    w2_ref: (Hp, Op)       second linear weight (bf16, O padded to 128)
    b2_ref: (1, Op)        second linear bias (f32)
    o_ref : (TB, Op)       output tile (lane-dense, sliced to O outside)
    """
    # Hidden layer: bf16 matmul on MXU, f32 accumulation.
    h = jnp.dot(x_ref[...], w1_ref[...], preferred_element_type=jnp.float32)
    h = jnp.maximum(h + b1_ref[...], 0.0)  # bias + ReLU in f32 on the VPU
    # Output head: lane-dense (Op = multiple of 128) so it stays on the MXU
    # and the store is an unmasked full-width vst.
    o = jnp.dot(h.astype(w2_ref.dtype), w2_ref[...],
                preferred_element_type=jnp.float32)
    o_ref[...] = (o + b2_ref[...]).astype(o_ref.dtype)


def nn_pandas_forward(x, w1, b1, w2, b2, *, batch_tile=512, use_bf16=True):
    """Forward pass: (batch, features) -> (batch, out_dim).

    batch_tile is the main tuning knob; keep it a multiple of 128 (v5e MXU)
    or 256 (v6e/v7x MXU). On v7x, pick it so the grid has >= 2 steps when the
    batch is large, so both TensorCores get work from the "parallel" axis.
    """
    B, F = x.shape
    H = w1.shape[1]
    O = w2.shape[1]
    out_dtype = x.dtype

    # Lane-align hidden and output widths (zero padding is exact: relu(0)=0 and
    # zero rows/cols of W2/b2 contribute nothing to the first O columns).
    H_pad = _round_up(H, _LANE)
    O_pad = _round_up(O, _LANE)

    # Clamp the tile for small batches so we don't pad a tiny batch up to a
    # huge tile, then pad the batch to a tile multiple (arbitrary B supported).
    bt = max(_SUBLANE, min(batch_tile, _round_up(B, _SUBLANE)))
    bt = _round_up(bt, _SUBLANE)
    B_pad = _round_up(B, bt)
    grid = (B_pad // bt,)

    mm_dtype = jnp.bfloat16 if use_bf16 else x.dtype

    xp = jnp.zeros((B_pad, F), mm_dtype).at[:B, :].set(x.astype(mm_dtype))
    w1p = jnp.zeros((F, H_pad), mm_dtype).at[:, :H].set(w1.astype(mm_dtype))
    b1p = jnp.zeros((1, H_pad), jnp.float32).at[:, :H].set(b1.astype(jnp.float32))
    w2p = jnp.zeros((H_pad, O_pad), mm_dtype).at[:H, :O].set(w2.astype(mm_dtype))
    b2p = jnp.zeros((1, O_pad), jnp.float32).at[:, :O].set(b2.astype(jnp.float32))

    itm = jnp.dtype(mm_dtype).itemsize
    out_itm = jnp.dtype(out_dtype).itemsize

    # Rough VMEM budget: double-buffered x/out tiles + (conservatively double-
    # buffered) resident weights/biases + the f32 hidden intermediate.  Clamp to
    # 64 MiB so the request is valid on v7x's smaller VMEM.
    vmem_est = (2 * bt * F * itm
                + 2 * (F * H_pad + H_pad * O_pad) * itm
                + 2 * (H_pad + O_pad) * 4
                + 2 * bt * O_pad * out_itm
                + bt * H_pad * 4)
    vmem_limit = int(min(max(2 * vmem_est, 32 * 1024 * 1024), 64 * 1024 * 1024))

    cost = pl.CostEstimate(
        flops=2 * B_pad * F * H_pad + 2 * B_pad * H_pad * O_pad,
        transcendentals=0,
        bytes_accessed=int(xp.size * itm + w1p.size * itm + w2p.size * itm
                           + b1p.size * 4 + b2p.size * 4
                           + B_pad * O_pad * out_itm),
    )

    out = pl.pallas_call(
        _mlp_kernel,
        out_shape=jax.ShapeDtypeStruct((B_pad, O_pad), out_dtype),
        grid_spec=pltpu.PrefetchScalarGridSpec(
            num_scalar_prefetch=0,
            grid=grid,
            in_specs=[
                pl.BlockSpec((bt, F), lambda i: (i, 0)),        # x: streamed over batch
                pl.BlockSpec((F, H_pad), lambda i: (0, 0)),     # w1: resident
                pl.BlockSpec((1, H_pad), lambda i: (0, 0)),     # b1: resident
                pl.BlockSpec((H_pad, O_pad), lambda i: (0, 0)), # w2: resident
                pl.BlockSpec((1, O_pad), lambda i: (0, 0)),     # b2: resident
            ],
            out_specs=pl.BlockSpec((bt, O_pad), lambda i: (i, 0)),
        ),
        compiler_params=pltpu.CompilerParams(
            dimension_semantics=("parallel",),
            vmem_limit_bytes=vmem_limit,
        ),
        cost_estimate=cost,
    )(xp, w1p, b1p, w2p, b2p)

    # Slice away batch and output-lane padding.
    return out[:B, :O]


def _ref_forward_quantized(x, w1, b1, w2, b2):
    """Reference matching the kernel's bf16-operand / f32-accumulate numerics."""
    q = lambda a: a.astype(jnp.bfloat16).astype(jnp.float32)
    h = jnp.maximum(q(x) @ q(w1) + b1, 0.0)
    return q(h) @ q(w2) + b2


if __name__ == "__main__":
    # Small tabular shapes: batch of 16 rows, 32 concatenated pandas features.
    batch, features, hidden, out_dim = 16, 32, 64, 1

    key = jax.random.PRNGKey(0)
    k_x, k_w1, k_b1, k_w2, k_b2 = jax.random.split(key, 5)

    x = jax.random.normal(k_x, (batch, features), dtype=jnp.float32)
    # Deterministic synthetic parameter init (Glorot-ish scaling).
    w1 = jax.random.normal(k_w1, (features, hidden), dtype=jnp.float32) * (1.0 / features ** 0.5)
    b1 = jax.random.normal(k_b1, (1, hidden), dtype=jnp.float32) * 0.01
    w2 = jax.random.normal(k_w2, (hidden, out_dim), dtype=jnp.float32) * (1.0 / hidden ** 0.5)
    b2 = jax.random.normal(k_b2, (1, out_dim), dtype=jnp.float32) * 0.01

    out = nn_pandas_forward(x, w1, b1, w2, b2)  # batch_tile auto-clamped for tiny batch
    out = jax.block_until_ready(out)

    ref = _ref_forward_quantized(x, w1, b1, w2, b2)
    assert out.shape == (batch, out_dim), out.shape
    assert jnp.allclose(out, ref, atol=2e-3, rtol=2e-3), "mismatch vs reference"

    print("KERNEL_OK")
</pallas_src>

<mosaic_0001>
module attributes {stable_mosaic.version = 11 : i64} {
  func.func @_mlp_kernel(%arg0: i32, %arg1: memref<16x32xbf16, #tpu.memory_space<vmem>>, %arg2: memref<32x128xbf16, #tpu.memory_space<vmem>>, %arg3: memref<1x128xf32, #tpu.memory_space<vmem>>, %arg4: memref<128x128xbf16, #tpu.memory_space<vmem>>, %arg5: memref<1x128xf32, #tpu.memory_space<vmem>>, %arg6: memref<16x128xf32, #tpu.memory_space<vmem>>) attributes {dimension_semantics = [#tpu.dimension_semantics<parallel>], iteration_bounds = array<i64: 1>, scalar_prefetch = 0 : i64, scratch_operands = 0 : i64, tpu.core_type = #tpu.core_type<tc>, window_params = [{transform_indices = @transform_0, window_bounds = array<i64: 16, 32>}, {pipeline_mode = #tpu.pipeline_mode<synchronous>, transform_indices = @transform_1, window_bounds = array<i64: 32, 128>}, {pipeline_mode = #tpu.pipeline_mode<synchronous>, transform_indices = @transform_2, window_bounds = array<i64: 1, 128>}, {pipeline_mode = #tpu.pipeline_mode<synchronous>, transform_indices = @transform_3, window_bounds = array<i64: 128, 128>}, {pipeline_mode = #tpu.pipeline_mode<synchronous>, transform_indices = @transform_4, window_bounds = array<i64: 1, 128>}, {transform_indices = @transform_5, window_bounds = array<i64: 16, 128>}]} {
    %c0 = arith.constant 0 : index
    %c0_0 = arith.constant 0 : index
    %0 = vector.load %arg1[%c0, %c0_0] : memref<16x32xbf16, #tpu.memory_space<vmem>>, vector<16x32xbf16>
    %c0_1 = arith.constant 0 : index
    %c0_2 = arith.constant 0 : index
    %1 = vector.load %arg2[%c0_1, %c0_2] : memref<32x128xbf16, #tpu.memory_space<vmem>>, vector<32x128xbf16>
    %cst = arith.constant dense<0.000000e+00> : vector<16x128xf32>
    %2 = tpu.matmul %0, %1, %cst {dimension_numbers = #tpu.dot_dimension_numbers<[1], [0], [0], [1], [0, 0, 1, 1], [], []>} : vector<16x32xbf16>, vector<32x128xbf16>, vector<16x128xf32> -> vector<16x128xf32>
    %c0_3 = arith.constant 0 : index
    %c0_4 = arith.constant 0 : index
    %3 = vector.load %arg3[%c0_3, %c0_4] : memref<1x128xf32, #tpu.memory_space<vmem>>, vector<1x128xf32>
    %4 = vector.broadcast %3 : vector<1x128xf32> to vector<16x128xf32>
    %5 = arith.addf %2, %4 : vector<16x128xf32>
    %cst_5 = arith.constant 0.000000e+00 : f32
    %6 = vector.broadcast %cst_5 : f32 to vector<16x128xf32>
    %7 = arith.maximumf %5, %6 : vector<16x128xf32>
    %8 = arith.truncf %7 : vector<16x128xf32> to vector<16x128xbf16>
    %c0_6 = arith.constant 0 : index
    %c0_7 = arith.constant 0 : index
    %9 = vector.load %arg4[%c0_6, %c0_7] : memref<128x128xbf16, #tpu.memory_space<vmem>>, vector<128x128xbf16>
    %cst_8 = arith.constant dense<0.000000e+00> : vector<16x128xf32>
    %10 = tpu.matmul %8, %9, %cst_8 {dimension_numbers = #tpu.dot_dimension_numbers<[1], [0], [0], [1], [0, 0, 1, 1], [], []>} : vector<16x128xbf16>, vector<128x128xbf16>, vector<16x128xf32> -> vector<16x128xf32>
    %c0_9 = arith.constant 0 : index
    %c0_10 = arith.constant 0 : index
    %11 = vector.load %arg5[%c0_9, %c0_10] : memref<1x128xf32, #tpu.memory_space<vmem>>, vector<1x128xf32>
    %12 = vector.broadcast %11 : vector<1x128xf32> to vector<16x128xf32>
    %13 = arith.addf %10, %12 : vector<16x128xf32>
    %c0_11 = arith.constant 0 : index
    %c0_12 = arith.constant 0 : index
    %14 = vector.load %arg6[%c0_11, %c0_12] : memref<16x128xf32, #tpu.memory_space<vmem>>, vector<16x128xf32>
    tpu.vector_store %arg6[%c0_11, %c0_12], %13 {strides = array<i32>} : memref<16x128xf32, #tpu.memory_space<vmem>>, vector<16x128xf32>,
    return
  }
  func.func @transform_0(%arg0: i32) -> (i32, i32) {
    %c0_i32 = arith.constant 0 : i32
    %c0_i32_0 = arith.constant 0 : i32
    return %arg0, %c0_i32 : i32, i32
  }
  func.func @transform_1(%arg0: i32) -> (i32, i32) {
    %c0_i32 = arith.constant 0 : i32
    %c0_i32_0 = arith.constant 0 : i32
    %c0_i32_1 = arith.constant 0 : i32
    return %c0_i32, %c0_i32_0 : i32, i32
  }
  func.func @transform_2(%arg0: i32) -> (i32, i32) {
    %c0_i32 = arith.constant 0 : i32
    %c0_i32_0 = arith.constant 0 : i32
    %c0_i32_1 = arith.constant 0 : i32
    return %c0_i32, %c0_i32_0 : i32, i32
  }
  func.func @transform_3(%arg0: i32) -> (i32, i32) {
    %c0_i32 = arith.constant 0 : i32
    %c0_i32_0 = arith.constant 0 : i32
    %c0_i32_1 = arith.constant 0 : i32
    return %c0_i32, %c0_i32_0 : i32, i32
  }
  func.func @transform_4(%arg0: i32) -> (i32, i32) {
    %c0_i32 = arith.constant 0 : i32
    %c0_i32_0 = arith.constant 0 : i32
    %c0_i32_1 = arith.constant 0 : i32
    return %c0_i32, %c0_i32_0 : i32, i32
  }
  func.func @transform_5(%arg0: i32) -> (i32, i32) {
    %c0_i32 = arith.constant 0 : i32
    %c0_i32_0 = arith.constant 0 : i32
    return %arg0, %c0_i32 : i32, i32
  }
}

</mosaic_0001>

<llo_original>
// kernel: tpu_custom_call.1
$region0: #{tpu_custom_call.1}
  #allocation0 [shape = 'u32[]', space=smem, size = 0x4, offset = 0x4, fixed_abs, tag = 'smem constant byte address 0x4 - core index']
  #allocation1 [shape = 'u32[144,128]{1,0:T(1,128)}', space=vmem, size = 0x12000, scoped, tag = 'internal scratch']
  %s0 = inlined_call_operand.hbm [shape: bf16[16,32], index: 0, kind: input, shape index: {}]
  %s1 = inlined_call_operand.hbm [shape: bf16[32,128], index: 1, kind: input, shape index: {}]
  %s2 = inlined_call_operand.vmem [shape: f32[1,128], index: 2, kind: input, shape index: {}]
  %s3 = inlined_call_operand.hbm [shape: bf16[128,128], index: 3, kind: input, shape index: {}]
  %s4 = inlined_call_operand.vmem [shape: f32[1,128], index: 4, kind: input, shape index: {}]
  %s5 = inlined_call_operand.hbm [shape: f32[16,128], index: 5, kind: output, shape index: {}]
  %s6 = sld [smem:[#allocation0]]
  $region42: #{tpu_custom_call.1} parent=0
    _
  %s8 = ssub.s32 1, %s6
  %s9 = scalar_select 0, %s8, %s6
  $region1: #{tpu_custom_call.1} parent=0
    #allocation2 [shape = 'u8[4096]{0}', space=vmem, size = 0x1000, scoped, tag = 'input window, operand 0, single buffered']
    #allocation3 [shape = 's32[1]{0}', space=sflag, size = 0x4, scoped, tag = 'scoped memory for tpu_custom_call.1']
    #allocation4 [shape = 's32[1]{0}', space=sflag, size = 0x4, scoped, tag = 'scoped memory for tpu_custom_call.1']
    #allocation5 [shape = 'u8[8192]{0}', space=vmem, size = 0x2000, scoped, tag = 'input window, operand 1, single buffered']
    #allocation6 [shape = 's32[1]{0}', space=sflag, size = 0x4, scoped, tag = 'scoped memory for tpu_custom_call.1']
    #allocation7 [shape = 'u8[32768]{0}', space=vmem, size = 0x8000, scoped, tag = 'input window, operand 3, single buffered']
    #allocation8 [shape = 'u8[8192]{0}', space=vmem, size = 0x2000, scoped, tag = 'output window, operand 0, single buffered']
    %10 = vsyncpa [#allocation3], 0
    %11 = vsyncpa [#allocation6], 0
    %12 = vsyncpa [#allocation4], 0
    // Predicated region
    $region2: #{tpu_custom_call.1} parent=1 // pred_check
      _
    $region3: #{tpu_custom_call.1} parent=1 // pred_check_branch
      %14 = sbr.rel (0) target = $region5
    $region4: #{tpu_custom_call.1} parent=1 // pred_region
      %s16 = ssub.s32 128, 128
      %17 = vsyncadd [#allocation3], %s16
      %s18 = sshll.u32 [#allocation2], 4
      %s19 = int_to_ptr.vmem [resolvable:$true] %s18
      %24 = dma.hbm_to_vmem [thread:$0]  %s0, 128, %s19, [#allocation3], 64, 64, 4
    $region5: #{tpu_custom_call.1} parent=1 // pred_fallthru
      _
    // Predicated region
    $region6: #{tpu_custom_call.1} parent=1 // pred_check
      _
    $region7: #{tpu_custom_call.1} parent=1 // pred_check_branch
      %26 = sbr.rel (0) target = $region9
    $region8: #{tpu_custom_call.1} parent=1 // pred_region
      %s28 = ssub.s32 256, 256
      %29 = vsyncadd [#allocation6], %s28
      %s30 = sshll.u32 [#allocation5], 4
      %s31 = int_to_ptr.vmem [resolvable:$true] %s30
      %36 = dma.hbm_to_vmem [thread:$0]  %s1, 256, %s31, [#allocation6], 64, 64, 4
    $region9: #{tpu_custom_call.1} parent=1 // pred_fallthru
      _
    // Predicated region
    $region10: #{tpu_custom_call.1} parent=1 // pred_check
      _
    $region11: #{tpu_custom_call.1} parent=1 // pred_check_branch
      %38 = sbr.rel (0) target = $region13
    $region12: #{tpu_custom_call.1} parent=1 // pred_region
      _
    $region13: #{tpu_custom_call.1} parent=1 // pred_fallthru
      _
    // Predicated region
    $region14: #{tpu_custom_call.1} parent=1 // pred_check
      _
    $region15: #{tpu_custom_call.1} parent=1 // pred_check_branch
      %40 = sbr.rel (0) target = $region17
    $region16: #{tpu_custom_call.1} parent=1 // pred_region
      %s42 = ssub.s32 1024, 1024
      %43 = vsyncadd [#allocation6], %s42
      %s44 = sshll.u32 [#allocation7], 4
      %s45 = int_to_ptr.vmem [resolvable:$true] %s44
      %50 = dma.hbm_to_vmem [thread:$0]  %s3, 1024, %s45, [#allocation6], 64, 64, 4
    $region17: #{tpu_custom_call.1} parent=1 // pred_fallthru
      _
    // Predicated region
    $region18: #{tpu_custom_call.1} parent=1 // pred_check
      _
    $region19: #{tpu_custom_call.1} parent=1 // pred_check_branch
      %52 = sbr.rel (0) target = $region21
    $region20: #{tpu_custom_call.1} parent=1 // pred_region
      _
    $region21: #{tpu_custom_call.1} parent=1 // pred_fallthru
      _
    // Predicated region
    $region22: #{tpu_custom_call.1} parent=1 // pred_check
      _
    $region23: #{tpu_custom_call.1} parent=1 // pred_check_branch
      %54 = sbr.rel (0) target = $region25
    $region24: #{tpu_custom_call.1} parent=1 // pred_region
      %55 = dma.done [#allocation3], 128
    $region25: #{tpu_custom_call.1} parent=1 // pred_fallthru
      _
    // Predicated region
    $region26: #{tpu_custom_call.1} parent=1 // pred_check
      _
    $region27: #{tpu_custom_call.1} parent=1 // pred_check_branch
      %57 = sbr.rel (0) target = $region29
    $region28: #{tpu_custom_call.1} parent=1 // pred_region
      %58 = dma.done [#allocation6], 256
    $region29: #{tpu_custom_call.1} parent=1 // pred_fallthru
      _
    // Predicated region
    $region30: #{tpu_custom_call.1} parent=1 // pred_check
      _
    $region31: #{tpu_custom_call.1} parent=1 // pred_check_branch
      %60 = sbr.rel (0) target = $region33
    $region32: #{tpu_custom_call.1} parent=1 // pred_region
      %61 = dma.done [#allocation6], 1024
    $region33: #{tpu_custom_call.1} parent=1 // pred_fallthru
      _
    %v63 = vld [vmem:[#allocation2] sm:$0xf]
    %v64 = vld [vmem:[#allocation2 + $0x4] sm:$0xf]
    %v65 = vld [vmem:[#allocation5] sm:$0xf]
    %v66 = vld [vmem:[#allocation5 + $0x4] sm:$0xf]
    %v67 = vld [vmem:[#allocation5 + $0x8] sm:$0xf]
    %v68 = vld [vmem:[#allocation5 + $0xc] sm:$0xf]
    %v69 = vld [vmem:[%s2] sm:$0x1]
    %v71 = vlaneseq
    %v72 = vshrl.u32 %v71, 7
    %v73 = vsub.s32 0, %v72
    %v74 = vrot.slane %v69, %v73
    %v78 = vunpack.c.l.b16 %v63
    %v79 = vunpack.c.l.b16 %v64
    %v80 = vpack.c.b16 %v79, %v78
    %v85 = vunpack.c.l.b16 %v65
    %v86 = vunpack.c.l.b16 %v66
    %v87 = vunpack.c.l.b16 %v67
    %v88 = vunpack.c.l.b16 %v68
    %v89 = vpack.c.b16 %v86, %v85
    %v90 = vpack.c.b16 %v88, %v87
    %vm93 = vcmask 261120
    %v95 = vsel %vm93, %v80, 0
    %97 = vmatprep.subr.bf16.mxu0 0
    %98 = vmatpush1.bf16.msra.mxu0 %v89
    %99 = vmatprep.subr.bf16.mxu0 0
    %100 = vmatpush1.bf16.msra.mxu0 %v90
    %101 = vmatprep.subr.bf16.mxu0 0
    %102 = vmatpush1.bf16.msra.mxu0 0
    %103 = vmatprep.subr.bf16.mxu0 0
    %104 = vmatpush1.bf16.msra.mxu0 0
    %105 = vmatprep.subr.bf16.mxu0 0
    %106 = vmatpush1.bf16.msra.mxu0 0
    %107 = vmatprep.subr.bf16.mxu0 0
    %108 = vmatpush1.bf16.msra.mxu0 0
    %109 = vmatprep.subr.bf16.mxu0 0
    %110 = vmatpush1.bf16.msra.mxu0 0
    %111 = vmatprep.subr.bf16.mxu0 0
    %112 = vmatpush1.bf16.msra.mxu0 0
    %113 = vmatprep.subr.bf16.mxu0 0
    %114 = vmatpush1.bf16.msra.mxu0 0
    %115 = vmatprep.subr.bf16.mxu0 0
    %116 = vmatpush1.bf16.msra.mxu0 0
    %117 = vmatprep.subr.bf16.mxu0 0
    %118 = vmatpush1.bf16.msra.mxu0 0
    %119 = vmatprep.subr.bf16.mxu0 0
    %120 = vmatpush1.bf16.msra.mxu0 0
    %121 = vmatprep.subr.bf16.mxu0 0
    %122 = vmatpush1.bf16.msra.mxu0 0
    %123 = vmatprep.subr.bf16.mxu0 0
    %124 = vmatpush1.bf16.msra.mxu0 0
    %125 = vmatprep.subr.bf16.mxu0 0
    %126 = vmatpush1.bf16.msra.mxu0 0
    %127 = vmatprep.subr.bf16.mxu0 0
    %128 = vmatpush1.bf16.msra.mxu0 0
    %129 = vmatprep.mubr.bf16.mxu0 0
    %130 = vmatmul.mubr.bf16.gmra.mrb[0].mxu0 %v95
    %v131 = vpop.f32.mrb[0].mxu0
    %v132 = vadd.f32 %v74, %v131
    %v133 = vpop.f32.mrb[0].mxu0
    %v134 = vpop.f32.mrb[0].mxu0
    %v135 = vadd.f32 %v74, %v134
    %v136 = vpop.f32.mrb[0].mxu0
    %137 = vdwg.mxu0
    %v138 = vmax.f32 %v132, 0.0
    %v139 = vmax.f32 %v135, 0.0
    %v140 = vpack.c.bf16 %v139, %v138
    %v141 = vld [vmem:[#allocation7] sm:$0xf]
    %v142 = vld [vmem:[#allocation7 + $0x4] sm:$0xf]
    %v143 = vld [vmem:[#allocation7 + $0x8] sm:$0xf]
    %v144 = vld [vmem:[#allocation7 + $0xc] sm:$0xf]
    %v145 = vld [vmem:[#allocation7 + $0x10] sm:$0xf]
    %v146 = vld [vmem:[#allocation7 + $0x14] sm:$0xf]
    %v147 = vld [vmem:[#allocation7 + $0x18] sm:$0xf]
    %v148 = vld [vmem:[#allocation7 + $0x1c] sm:$0xf]
    %v149 = vld [vmem:[#allocation7 + $0x20] sm:$0xf]
    %v150 = vld [vmem:[#allocation7 + $0x24] sm:$0xf]
    %v151 = vld [vmem:[#allocation7 + $0x28] sm:$0xf]
    %v152 = vld [vmem:[#allocation7 + $0x2c] sm:$0xf]
    %v153 = vld [vmem:[#allocation7 + $0x30] sm:$0xf]
    %v154 = vld [vmem:[#allocation7 + $0x34] sm:$0xf]
    %v155 = vld [vmem:[#allocation7 + $0x38] sm:$0xf]
    %v156 = vld [vmem:[#allocation7 + $0x3c] sm:$0xf]
    %v157 = vld [vmem:[%s4] sm:$0x1]
    %v159 = vlaneseq
    %v160 = vshrl.u32 %v159, 7
    %v161 = vsub.s32 0, %v160
    %v162 = vrot.slane %v157, %v161
    %v180 = vunpack.c.l.b16 %v141
    %v181 = vunpack.c.l.b16 %v142
    %v182 = vunpack.c.l.b16 %v143
    %v183 = vunpack.c.l.b16 %v144
    %v184 = vunpack.c.l.b16 %v145
    %v185 = vunpack.c.l.b16 %v146
    %v186 = vunpack.c.l.b16 %v147
    %v187 = vunpack.c.l.b16 %v148
    %v188 = vunpack.c.l.b16 %v149
    %v189 = vunpack.c.l.b16 %v150
    %v190 = vunpack.c.l.b16 %v151
    %v191 = vunpack.c.l.b16 %v152
    %v192 = vunpack.c.l.b16 %v153
    %v193 = vunpack.c.l.b16 %v154
    %v194 = vunpack.c.l.b16 %v155
    %v195 = vunpack.c.l.b16 %v156
    %v196 = vpack.c.b16 %v181, %v180
    %v197 = vpack.c.b16 %v183, %v182
    %v198 = vpack.c.b16 %v185, %v184
    %v199 = vpack.c.b16 %v187, %v186
    %v200 = vpack.c.b16 %v189, %v188
    %v201 = vpack.c.b16 %v191, %v190
    %v202 = vpack.c.b16 %v193, %v192
    %v203 = vpack.c.b16 %v195, %v194
    %212 = vmatprep.subr.bf16.mxu0 0
    %213 = vmatpush1.bf16.msra.mxu0 %v196
    %214 = vmatprep.subr.bf16.mxu0 0
    %215 = vmatpush1.bf16.msra.mxu0 %v197
    %216 = vmatprep.subr.bf16.mxu0 0
    %217 = vmatpush1.bf16.msra.mxu0 %v198
    %218 = vmatprep.subr.bf16.mxu0 0
    %219 = vmatpush1.bf16.msra.mxu0 %v199
    %220 = vmatprep.subr.bf16.mxu0 0
    %221 = vmatpush1.bf16.msra.mxu0 %v200
    %222 = vmatprep.subr.bf16.mxu0 0
    %223 = vmatpush1.bf16.msra.mxu0 %v201
    %224 = vmatprep.subr.bf16.mxu0 0
    %225 = vmatpush1.bf16.msra.mxu0 %v202
    %226 = vmatprep.subr.bf16.mxu0 0
    %227 = vmatpush1.bf16.msra.mxu0 %v203
    %228 = vmatprep.subr.bf16.mxu0 0
    %229 = vmatpush1.bf16.msra.mxu0 0
    %230 = vmatprep.subr.bf16.mxu0 0
    %231 = vmatpush1.bf16.msra.mxu0 0
    %232 = vmatprep.subr.bf16.mxu0 0
    %233 = vmatpush1.bf16.msra.mxu0 0
    %234 = vmatprep.subr.bf16.mxu0 0
    %235 = vmatpush1.bf16.msra.mxu0 0
    %236 = vmatprep.subr.bf16.mxu0 0
    %237 = vmatpush1.bf16.msra.mxu0 0
    %238 = vmatprep.subr.bf16.mxu0 0
    %239 = vmatpush1.bf16.msra.mxu0 0
    %240 = vmatprep.subr.bf16.mxu0 0
    %241 = vmatpush1.bf16.msra.mxu0 0
    %242 = vmatprep.subr.bf16.mxu0 0
    %243 = vmatpush1.bf16.msra.mxu0 0
    %244 = vmatprep.mubr.bf16.mxu0 0
    %245 = vmatmul.mubr.bf16.gmra.mrb[0].mxu0 %v140
    %v246 = vpop.f32.mrb[0].mxu0
    %v247 = vadd.f32 %v162, %v246
    %v248 = vpop.f32.mrb[0].mxu0
    %v249 = vpop.f32.mrb[0].mxu0
    %v250 = vadd.f32 %v162, %v249
    %v251 = vpop.f32.mrb[0].mxu0
    %252 = vdwg.mxu0
    %253 = vst [vmem:[#allocation8] sm:$0xff] %v247
    %254 = vst [vmem:[#allocation8 + $0x8] sm:$0xff] %v250
    // Predicated region
    $region34: #{tpu_custom_call.1} parent=1 // pred_check
      _
    $region35: #{tpu_custom_call.1} parent=1 // pred_check_branch
      %256 = sbr.rel (0) target = $region37
    $region36: #{tpu_custom_call.1} parent=1 // pred_region
      %s258 = ssub.s32 256, 256
      %259 = vsyncadd [#allocation4], %s258
      %s260 = sshll.u32 [#allocation8], 4
      %s261 = int_to_ptr.vmem [resolvable:$true] %s260
      %266 = dma.vmem_to_hbm [thread:$0]  %s261, 256, %s5, [#allocation4], 128, 128, 8
    $region37: #{tpu_custom_call.1} parent=1 // pred_fallthru
      _
    // Predicated region
    $region38: #{tpu_custom_call.1} parent=1 // pred_check
      _
    $region39: #{tpu_custom_call.1} parent=1 // pred_check_branch
      %268 = sbr.rel (0) target = $region41
    $region40: #{tpu_custom_call.1} parent=1 // pred_region
      %269 = dma.done [#allocation4], 256
    $region41: #{tpu_custom_call.1} parent=1 // pred_fallthru
      _
    %270 = vsyncpa [#allocation3], 1
    %271 = vsyncpa [#allocation6], 1
    %272 = vsyncpa [#allocation4], 1

</llo_original>
